<compile_context>
chip_gen: v7x
topology: tpu7x:2x2x1
jax: 0.10.0
libtpu: 0.0.40
codegen_flags: <defaults>
</compile_context>

<pallas_src>
import functools

import numpy as np
import jax
import jax.numpy as jnp
from jax.experimental import pallas as pl
from jax.experimental.pallas import tpu as pltpu


def _det_kernel(x_ref, ctab_ref, offs_ref, o_ref, *, approx_sigmoid, transpose_out):
    # x_ref   : (C, GGt)  channel-major slab (C = num_anchors * bbox_attrs)
    # ctab_ref: (C, 4)    columns = [mul, is_exp, add_x_sel, add_y_sel]
    # offs_ref: (2, GGt)  rows    = [x_off*stride, y_off*stride]
    # o_ref   : (GGt, C)  if transpose_out else (C, GGt)
    x = x_ref[...].astype(jnp.float32)          # lane-dense compute (lanes = GG tile)
    ct = ctab_ref[...]
    cmul = ct[:, 0:1]                           # per-channel multiplier        (C, 1)
    is_exp = ct[:, 1:2] > 0.0                   # (C, 1); let jnp.where broadcast
    cxs = ct[:, 2:3]                            # 1.0 where attr == 0 (x coord) (C, 1)
    cys = ct[:, 3:4]                            # 1.0 where attr == 1 (y coord) (C, 1)
    offs = offs_ref[...]
    xoff = offs[0:1, :]                         # (1, GGt), already * stride
    yoff = offs[1:2, :]

    # Single exp pass; sigmoid derived from the same exp (2 EUP passes total).
    e = jnp.exp(x)
    if approx_sigmoid:
        sig = e * pl.reciprocal(1.0 + e, approx=True)
    else:
        sig = e / (1.0 + e)
    sig = jnp.where(x > 30.0, 1.0, sig)         # guard: avoid inf/inf -> NaN
    val = jnp.where(is_exp, e, sig)

    # out = f(x) * mul + offset   (offsets already carry the stride factor)
    y = val * cmul + cxs * xoff + cys * yoff    # (C, GGt), f32

    # Cast BEFORE the transpose: with a narrow out dtype this halves the vregs
    # pushed through the XLU and the vst / output-VMEM footprint.
    y = y.astype(o_ref.dtype)
    if transpose_out:
        o_ref[...] = jnp.transpose(y, (1, 0))   # (C, GGt) -> (GGt, C), XLU slot
    else:
        o_ref[...] = y                          # attribute-major layout, no transpose


def _build_tables(anchors, num_classes, grid_size, stride):
    """Tiny per-channel / per-cell constant tables (KB-scale)."""
    na = len(anchors)
    A = 5 + num_classes
    C = na * A
    ctab = np.zeros((C, 4), np.float32)
    ctab[:, 0] = 1.0                                         # default: sigmoid * 1
    for a, (aw, ah) in enumerate(anchors):
        base = a * A
        ctab[base + 0, 0] = stride; ctab[base + 0, 2] = 1.0    # x: (sig + xo) * stride
        ctab[base + 1, 0] = stride; ctab[base + 1, 3] = 1.0    # y: (sig + yo) * stride
        ctab[base + 2, 0] = float(aw); ctab[base + 2, 1] = 1.0  # w: exp * anchor_w
        ctab[base + 3, 0] = float(ah); ctab[base + 3, 1] = 1.0  # h: exp * anchor_h
    p = np.arange(grid_size * grid_size)
    offs = np.stack([(p % grid_size).astype(np.float32) * stride,
                     (p // grid_size).astype(np.float32) * stride], axis=0)
    return jnp.asarray(ctab), jnp.asarray(offs)


def _pick_gg_tile(GG, B, *, min_steps=8, min_tile=128):
    """Split GG into 128-multiple tiles only when it buys pipeline depth."""
    if GG % 128 != 0:
        return GG                               # G = 13/26/52 etc.: whole-GG block
    tile = GG
    while (B * (GG // tile) < min_steps
           and tile // 2 >= min_tile
           and (tile // 2) % 128 == 0):
        tile //= 2
    return tile


def detection_layer(x, inp_dim, anchors, num_classes, *, out_dtype=None,
                    approx_sigmoid=False, channel_major_out=False):
    """x: (B, num_anchors*(5+num_classes), G, G), NCHW like PyTorch.

    Default returns (B, G*G*num_anchors, 5+num_classes), matching
    transform_prediction.  With channel_major_out=True returns the same data
    attribute-major as (B, C, G*G) (no transpose, no lane padding) for narrow
    heads whose consumer can take that layout.
    """
    B, C, G, G2 = x.shape
    assert G == G2
    na = len(anchors)
    A = 5 + num_classes
    assert C == na * A
    stride = inp_dim // G
    GG = G * G
    out_dtype = x.dtype if out_dtype is None else out_dtype

    ctab, offs = _build_tables(anchors, num_classes, G, stride)
    xr = x.reshape(B, C, GG)                    # contiguous reshape: free, no transpose

    gg_tile = _pick_gg_tile(GG, B)
    n_gg = GG // gg_tile
    transpose_out = not channel_major_out

    if transpose_out:
        out_shape = jax.ShapeDtypeStruct((B, GG, C), out_dtype)
        out_spec = pl.BlockSpec((pl.Squeezed(), gg_tile, C), lambda b, g: (b, g, 0))
    else:
        out_shape = jax.ShapeDtypeStruct((B, C, GG), out_dtype)
        out_spec = pl.BlockSpec((pl.Squeezed(), C, gg_tile), lambda b, g: (b, 0, g))

    kernel = functools.partial(_det_kernel, approx_sigmoid=approx_sigmoid,
                               transpose_out=transpose_out)

    out = pl.pallas_call(
        kernel,
        out_shape=out_shape,
        grid_spec=pltpu.PrefetchScalarGridSpec(
            num_scalar_prefetch=0,
            grid=(B, n_gg),
            in_specs=[
                pl.BlockSpec((pl.Squeezed(), C, gg_tile), lambda b, g: (b, 0, g)),
                pl.BlockSpec((C, 4), lambda b, g: (0, 0)),     # constant block index
                pl.BlockSpec((2, gg_tile), lambda b, g: (0, g)),
            ],
            out_specs=out_spec,
        ),
        compiler_params=pltpu.CompilerParams(
            dimension_semantics=("parallel", "parallel"),
            vmem_limit_bytes=32 * 1024 * 1024),   # guards v5e's 16 MiB default
    )(xr, ctab, offs)

    if transpose_out:
        # (B, GG, C) row-major data is exactly the (B, N, A) data: free reshape.
        return out.reshape(B, GG * na, A)
    return out


def _reference(x, inp_dim, anchors, num_classes):
    """Pure-numpy port of transform_prediction for verification."""
    B, C, G, _ = x.shape
    na = len(anchors)
    A = 5 + num_classes
    stride = inp_dim // G
    anchors_s = np.array([(a[0] / stride, a[1] / stride) for a in anchors],
                         np.float32)
    p = x.reshape(B, A * na, G * G).transpose(0, 2, 1).reshape(B, G * G * na, A)
    p = np.array(p, dtype=np.float32)
    p[:, :, 0] = 1.0 / (1.0 + np.exp(-p[:, :, 0]))
    p[:, :, 1] = 1.0 / (1.0 + np.exp(-p[:, :, 1]))
    p[:, :, 4] = 1.0 / (1.0 + np.exp(-p[:, :, 4]))
    a, b = np.meshgrid(np.arange(G), np.arange(G))
    xo = a.reshape(-1, 1).astype(np.float32)
    yo = b.reshape(-1, 1).astype(np.float32)
    xy = np.concatenate([xo, yo], 1)
    xy = np.tile(xy, (1, na)).reshape(-1, 2)[None]
    p[:, :, :2] += xy
    anch = np.tile(anchors_s, (G * G, 1))[None]
    p[:, :, 2:4] = np.exp(p[:, :, 2:4]) * anch
    p[:, :, 5:5 + num_classes] = 1.0 / (1.0 + np.exp(-p[:, :, 5:5 + num_classes]))
    p[:, :, :4] *= stride
    return p


if __name__ == "__main__":
    anchors = [(10.0, 13.0), (16.0, 30.0), (33.0, 23.0)]
    num_classes = 3
    num_anchors = len(anchors)
    bbox_attrs = 5 + num_classes          # 8
    B, G = 2, 16
    inp_dim = 64                          # stride = 4
    C = num_anchors * bbox_attrs          # 24

    key = jax.random.PRNGKey(0)
    x = jax.random.normal(key, (B, C, G, G), dtype=jnp.float32)
    ref = _reference(np.asarray(x), inp_dim, anchors, num_classes)

    # 1) f32, exact sigmoid, PyTorch-compatible (B, N, A) layout.
    out = detection_layer(x, inp_dim, anchors, num_classes)
    out = jax.block_until_ready(out)
    np.testing.assert_allclose(np.asarray(out), ref, rtol=1e-5, atol=1e-5)

    # 2) bf16 in / bf16 out + approx reciprocal (the fast path on v6e/v7x).
    out_bf16 = detection_layer(x.astype(jnp.bfloat16), inp_dim, anchors,
                               num_classes, out_dtype=jnp.bfloat16,
                               approx_sigmoid=True)
    out_bf16 = jax.block_until_ready(out_bf16)
    np.testing.assert_allclose(np.asarray(out_bf16, dtype=np.float32), ref,
                               rtol=5e-2, atol=5e-1)

    # 3) Attribute-major output (no transpose / no lane padding for narrow heads).
    out_cm = detection_layer(x, inp_dim, anchors, num_classes,
                             channel_major_out=True)
    out_cm = jax.block_until_ready(out_cm)
    ref_cm = ref.reshape(B, G * G, C).transpose(0, 2, 1)
    np.testing.assert_allclose(np.asarray(out_cm), ref_cm, rtol=1e-5, atol=1e-5)

    print("KERNEL_OK")
</pallas_src>

<mosaic_0001>
module attributes {stable_mosaic.version = 11 : i64} {
  func.func @_det_kernel(%arg0: i32, %arg1: i32, %arg2: memref<1x24x128xf32, #tpu.memory_space<vmem>>, %arg3: memref<24x4xf32, #tpu.memory_space<vmem>>, %arg4: memref<2x128xf32, #tpu.memory_space<vmem>>, %arg5: memref<1x128x24xf32, #tpu.memory_space<vmem>>) attributes {dimension_semantics = [#tpu.dimension_semantics<parallel>, #tpu.dimension_semantics<parallel>], iteration_bounds = array<i64: 2, 2>, scalar_prefetch = 0 : i64, scratch_operands = 0 : i64, tpu.core_type = #tpu.core_type<tc>, window_params = [{transform_indices = @transform_0, window_bounds = array<i64: 1, 24, 128>}, {pipeline_mode = #tpu.pipeline_mode<synchronous>, transform_indices = @transform_1, window_bounds = array<i64: 24, 4>}, {transform_indices = @transform_2, window_bounds = array<i64: 2, 128>}, {transform_indices = @transform_3, window_bounds = array<i64: 1, 128, 24>}]} {
    %c0 = arith.constant 0 : index
    %c0_0 = arith.constant 0 : index
    %c0_1 = arith.constant 0 : index
    %0 = vector.load %arg2[%c0, %c0_0, %c0_1] : memref<1x24x128xf32, #tpu.memory_space<vmem>>, vector<1x24x128xf32>
    %1 = vector.shape_cast %0 : vector<1x24x128xf32> to vector<24x128xf32>
    %c0_2 = arith.constant 0 : index
    %c0_3 = arith.constant 0 : index
    %2 = vector.load %arg3[%c0_2, %c0_3] : memref<24x4xf32, #tpu.memory_space<vmem>>, vector<24x4xf32>
    %3 = vector.extract_strided_slice %2 {offsets = [0, 0], sizes = [24, 1], strides = [1, 1]} : vector<24x4xf32> to vector<24x1xf32>
    %4 = vector.extract_strided_slice %2 {offsets = [0, 1], sizes = [24, 1], strides = [1, 1]} : vector<24x4xf32> to vector<24x1xf32>
    %cst = arith.constant 0.000000e+00 : f32
    %5 = vector.broadcast %cst : f32 to vector<24x1xf32>
    %6 = arith.cmpf ogt, %4, %5 : vector<24x1xf32>
    %7 = vector.extract_strided_slice %2 {offsets = [0, 2], sizes = [24, 1], strides = [1, 1]} : vector<24x4xf32> to vector<24x1xf32>
    %8 = vector.extract_strided_slice %2 {offsets = [0, 3], sizes = [24, 1], strides = [1, 1]} : vector<24x4xf32> to vector<24x1xf32>
    %c0_4 = arith.constant 0 : index
    %c0_5 = arith.constant 0 : index
    %9 = vector.load %arg4[%c0_4, %c0_5] : memref<2x128xf32, #tpu.memory_space<vmem>>, vector<2x128xf32>
    %10 = vector.extract_strided_slice %9 {offsets = [0, 0], sizes = [1, 128], strides = [1, 1]} : vector<2x128xf32> to vector<1x128xf32>
    %11 = vector.extract_strided_slice %9 {offsets = [1, 0], sizes = [1, 128], strides = [1, 1]} : vector<2x128xf32> to vector<1x128xf32>
    %12 = math.exp %1 : vector<24x128xf32>
    %cst_6 = arith.constant 1.000000e+00 : f32
    %13 = vector.broadcast %cst_6 : f32 to vector<24x128xf32>
    %14 = arith.addf %13, %12 : vector<24x128xf32>
    %15 = arith.divf %12, %14 : vector<24x128xf32>
    %cst_7 = arith.constant 3.000000e+01 : f32
    %16 = vector.broadcast %cst_7 : f32 to vector<24x128xf32>
    %17 = arith.cmpf ogt, %1, %16 : vector<24x128xf32>
    %cst_8 = arith.constant 1.000000e+00 : f32
    %18 = vector.broadcast %cst_8 : f32 to vector<24x128xf32>
    %19 = arith.select %17, %18, %15 : vector<24x128xi1>, vector<24x128xf32>
    %20 = vector.shape_cast %6 : vector<24x1xi1> to vector<24x1xi1>
    %21 = vector.broadcast %20 : vector<24x1xi1> to vector<24x128xi1>
    %22 = arith.select %21, %12, %19 : vector<24x128xi1>, vector<24x128xf32>
    %23 = vector.broadcast %3 : vector<24x1xf32> to vector<24x128xf32>
    %24 = arith.mulf %22, %23 : vector<24x128xf32>
    %25 = vector.broadcast %7 : vector<24x1xf32> to vector<24x128xf32>
    %26 = vector.broadcast %10 : vector<1x128xf32> to vector<24x128xf32>
    %27 = arith.mulf %25, %26 : vector<24x128xf32>
    %28 = arith.addf %24, %27 : vector<24x128xf32>
    %29 = vector.broadcast %8 : vector<24x1xf32> to vector<24x128xf32>
    %30 = vector.broadcast %11 : vector<1x128xf32> to vector<24x128xf32>
    %31 = arith.mulf %29, %30 : vector<24x128xf32>
    %32 = arith.addf %28, %31 : vector<24x128xf32>
    %33 = tpu.transpose %32, [1, 0] : vector<24x128xf32> -> vector<128x24xf32>
    %c0_9 = arith.constant 0 : index
    %c0_10 = arith.constant 0 : index
    %c0_11 = arith.constant 0 : index
    %34 = vector.load %arg5[%c0_9, %c0_10, %c0_11] : memref<1x128x24xf32, #tpu.memory_space<vmem>>, vector<1x128x24xf32>
    %35 = vector.shape_cast %34 : vector<1x128x24xf32> to vector<128x24xf32>
    %36 = vector.shape_cast %33 : vector<128x24xf32> to vector<1x128x24xf32>
    tpu.vector_store %arg5[%c0_9, %c0_10, %c0_11], %36 {strides = array<i32>} : memref<1x128x24xf32, #tpu.memory_space<vmem>>, vector<1x128x24xf32>,
    return
  }
  func.func @transform_0(%arg0: i32, %arg1: i32) -> (i32, i32, i32) {
    %c0_i32 = arith.constant 0 : i32
    %c0_i32_0 = arith.constant 0 : i32
    return %arg0, %c0_i32, %arg1 : i32, i32, i32
  }
  func.func @transform_1(%arg0: i32, %arg1: i32) -> (i32, i32) {
    %c0_i32 = arith.constant 0 : i32
    %c0_i32_0 = arith.constant 0 : i32
    %c0_i32_1 = arith.constant 0 : i32
    return %c0_i32, %c0_i32_0 : i32, i32
  }
  func.func @transform_2(%arg0: i32, %arg1: i32) -> (i32, i32) {
    %c0_i32 = arith.constant 0 : i32
    %c0_i32_0 = arith.constant 0 : i32
    return %c0_i32, %arg1 : i32, i32
  }
  func.func @transform_3(%arg0: i32, %arg1: i32) -> (i32, i32, i32) {
    %c0_i32 = arith.constant 0 : i32
    %c0_i32_0 = arith.constant 0 : i32
    return %arg0, %arg1, %c0_i32 : i32, i32, i32
  }
}

</mosaic_0001>

<llo_original>
// kernel: tpu_custom_call.1
$region0: #{tpu_custom_call.1}
  #allocation0 [shape = 'u32[]', space=smem, size = 0x4, offset = 0x4, fixed_abs, tag = 'smem constant byte address 0x4 - core index']
  #allocation1 [shape = 'u32[144,128]{1,0:T(1,128)}', space=vmem, size = 0x12000, scoped, tag = 'internal scratch']
  %s0 = inlined_call_operand.hbm [shape: f32[2,24,256], index: 0, kind: input, shape index: {}]
  %s1 = inlined_call_operand.vmem [shape: f32[24,4], index: 1, kind: input, shape index: {}]
  %s2 = inlined_call_operand.vmem [shape: f32[2,256], index: 2, kind: input, shape index: {}]
  %s3 = inlined_call_operand.vmem [shape: f32[2,256,24], index: 3, kind: output, shape index: {}]
  %s4 = sld [smem:[#allocation0]]
  $region49: #{tpu_custom_call.1} parent=0
    _
  %s6 = ssub.s32 1, %s4
  %s7 = scalar_select 0, %s6, %s4
  $region1: #{tpu_custom_call.1} parent=0
    #allocation2 [shape = 'u8[24576]{0}', space=vmem, size = 0x6000, scoped, tag = 'input window, operand 0']
    #allocation3 [shape = 's32[2]{0}', space=sflag, size = 0x8, scoped, tag = 'scoped memory for tpu_custom_call.1']
    %8 = vsyncpa [#allocation3], 0
    %s9 = scalar_lea.sflag [#allocation3], 1
    %10 = vsyncpa %s9, 0
    loop: start=0, step=1, limit=6
    $region2: #{tpu_custom_call.1} parent=1 // loop_pre_header
      _
    $region3: #{tpu_custom_call.1} parent=1 // loop_header
      %s12 = sphi 0, %s16
      %p13 = scmp.ge.s32.totalorder %s12, 6
      %s19 = sphi 0, %s31
      %s20 = sphi 0, %s27
      %s21 = sphi 0, %s19
      %s22 = sphi 0, %s20
      %s23 = sphi 0, %s21
      %s24 = sphi 0, %s22
      %s36 = sphi 0, %s38
      %s39 = sphi 0, %s36
      %s40 = sphi 0, %s39
      %s56 = sphi 0, %s40
      %s60 = sphi 0, %s60
      %s62 = sphi 0, %s60
      %s63 = sphi 0, %s62
      %s77 = sphi 0, %s63
      %s83 = sphi 0, %s85
      %s86 = sphi 0, %s83
      %s87 = sphi 0, %s86
      %s103 = sphi 0, %s87
      %s111 = sphi 0, %s113
      %s114 = sphi 0, %s111
      %s115 = sphi 0, %s114
      %s131 = sphi 0, %s115
    $region4: #{tpu_custom_call.1} parent=1 // loop_header_branch
      %15 = sbr.rel (%p13) target = $region8
    $region5: #{tpu_custom_call.1} parent=1 // loop_body
      %s17 = ssub.s32 %s12, 1
      %s18 = ssub.s32 %s12, 2
      %s25 = sadd.s32 1, %s20
      %p26 = scmp.ge.s32.totalorder %s25, 2
      %s27 = scalar_select %p26, 0, %s25
      %s28 = sadd.s32 1, %s19
      %s29 = scalar_select %p26, %s28, %s19
      %p30 = scmp.ge.s32.totalorder %s29, 2
      %s31 = scalar_select %p30, 0, %s29
      %s32 = ssub.s32 %s19, %s31
      %s33 = ssub.s32 %s20, %s27
      %s34 = sor.u32 %s32, %s33
      %p35 = scmp.eq.s32.totalorder %s34, 0
      %s37 = sadd.s32 %s36, 1
      %s38 = scalar_select %p35, %s36, %s37
      %p41 = pneg %p35
      %p42 = scmp.eq.s32.totalorder %s12, 3
      %p43 = por %p41, %p42
      %p44 = scmp.ne.s32.totalorder %s36, %s39
      %p45 = scmp.eq.s32.totalorder %s12, 0
      %p46 = por %p44, %p45
      %p47 = scmp.ne.s32.totalorder %s36, %s39
      %p48 = scmp.eq.s32.totalorder %s17, 3
      %p49 = por %p47, %p48
      %p50 = scmp.ne.s32.totalorder %s39, %s40
      %p51 = scmp.eq.s32.totalorder %s17, 0
      %p52 = por %p50, %p51
      %p53 = scmp.ne.s32.totalorder %s39, %s40
      %p54 = scmp.eq.s32.totalorder %s18, 3
      %p55 = por %p53, %p54
      %p57 = scmp.ne.s32.totalorder %s40, %s56
      %p58 = scmp.eq.s32.totalorder %s18, 0
      %p59 = por %p57, %p58
      %s61 = sadd.s32 %s60, 1
      %p64 = scmp.eq.s32.totalorder %s12, 3
      %p65 = scmp.ne.s32.totalorder %s60, %s62
      %p66 = scmp.eq.s32.totalorder %s12, 0
      %p67 = por %p65, %p66
      %p68 = scmp.ne.s32.totalorder %s60, %s62
      %p69 = scmp.eq.s32.totalorder %s17, 3
      %p70 = por %p68, %p69
      %p71 = scmp.ne.s32.totalorder %s62, %s63
      %p72 = scmp.eq.s32.totalorder %s17, 0
      %p73 = por %p71, %p72
      %p74 = scmp.ne.s32.totalorder %s62, %s63
      %p75 = scmp.eq.s32.totalorder %s18, 3
      %p76 = por %p74, %p75
      %p78 = scmp.ne.s32.totalorder %s63, %s77
      %p79 = scmp.eq.s32.totalorder %s18, 0
      %p80 = por %p78, %p79
      %s81 = ssub.s32 %s20, %s27
      %p82 = scmp.eq.s32.totalorder %s81, 0
      %s84 = sadd.s32 %s83, 1
      %s85 = scalar_select %p82, %s83, %s84
      %p88 = pneg %p82
      %p89 = scmp.eq.s32.totalorder %s12, 3
      %p90 = por %p88, %p89
      %p91 = scmp.ne.s32.totalorder %s83, %s86
      %p92 = scmp.eq.s32.totalorder %s12, 0
      %p93 = por %p91, %p92
      %p94 = scmp.ne.s32.totalorder %s83, %s86
      %p95 = scmp.eq.s32.totalorder %s17, 3
      %p96 = por %p94, %p95
      %p97 = scmp.ne.s32.totalorder %s86, %s87
      %p98 = scmp.eq.s32.totalorder %s17, 0
      %p99 = por %p97, %p98
      %p100 = scmp.ne.s32.totalorder %s86, %s87
      %p101 = scmp.eq.s32.totalorder %s18, 3
      %p102 = por %p100, %p101
      %p104 = scmp.ne.s32.totalorder %s87, %s103
      %p105 = scmp.eq.s32.totalorder %s18, 0
      %p106 = por %p104, %p105
      %s107 = ssub.s32 %s19, %s31
      %s108 = ssub.s32 %s20, %s27
      %s109 = sor.u32 %s107, %s108
      %p110 = scmp.eq.s32.totalorder %s109, 0
      %s112 = sadd.s32 %s111, 1
      %s113 = scalar_select %p110, %s111, %s112
      %p116 = pneg %p110
      %p117 = scmp.eq.s32.totalorder %s12, 3
      %p118 = por %p116, %p117
      %p119 = scmp.ne.s32.totalorder %s111, %s114
      %p120 = scmp.eq.s32.totalorder %s12, 0
      %p121 = por %p119, %p120
      %p122 = scmp.ne.s32.totalorder %s111, %s114
      %p123 = scmp.eq.s32.totalorder %s17, 3
      %p124 = por %p122, %p123
      %p125 = scmp.ne.s32.totalorder %s114, %s115
      %p126 = scmp.eq.s32.totalorder %s17, 0
      %p127 = por %p125, %p126
      %p128 = scmp.ne.s32.totalorder %s114, %s115
      %p129 = scmp.eq.s32.totalorder %s18, 3
      %p130 = por %p128, %p129
      %p132 = scmp.ne.s32.totalorder %s115, %s131
      %p133 = scmp.eq.s32.totalorder %s18, 0
      %p134 = por %p132, %p133
      %p135 = scmp.le.s32.totalorder 1, %s12
      %p136 = scmp.lt.s32.totalorder %s12, 5
      %p137 = pnand %p135, %p136
      %p138 = pneg %p137
      // Predicated region
      $region9: #{tpu_custom_call.1} parent=5 // pred_check
        _
      $region10: #{tpu_custom_call.1} parent=5 // pred_check_branch
        %140 = sbr.rel (%p137) target = $region12
      $region11: #{tpu_custom_call.1} parent=5 // pred_region
        %s141 = ssub.s32 %s12, 1
        // Predicated region
        $region13: #{tpu_custom_call.1} parent=11 // pred_check
          %p142 = pneg %p73
        $region14: #{tpu_custom_call.1} parent=11 // pred_check_branch
          %144 = sbr.rel (%p142) target = $region16
        $region15: #{tpu_custom_call.1} parent=11 // pred_region
          _
        $region16: #{tpu_custom_call.1} parent=11 // pred_fallthru
          _
      $region12: #{tpu_custom_call.1} parent=5 // pred_fallthru
        _
      %p145 = scmp.lt.s32.totalorder %s12, 4
      // Predicated region
      $region17: #{tpu_custom_call.1} parent=5 // pred_check
        %p146 = pneg %p145
      $region18: #{tpu_custom_call.1} parent=5 // pred_check_branch
        %148 = sbr.rel (%p146) target = $region20
      $region19: #{tpu_custom_call.1} parent=5 // pred_region
        // Predicated region
        $region21: #{tpu_custom_call.1} parent=19 // pred_check
          %p149 = pneg %p46
        $region22: #{tpu_custom_call.1} parent=19 // pred_check_branch
          %151 = sbr.rel (%p149) target = $region24
        $region23: #{tpu_custom_call.1} parent=19 // pred_region
          %s152 = sand.u32 %s36, 1
          %s153 = scalar_lea.sflag [#allocation3], %s152
          %s154 = sand.u32 %s36, 1
          %s155 = smul.addr %s154, 24
          %s156 = scalar_lea.vmem [#allocation2], %s155
          %s158 = ssub.s32 384, 384
          %159 = vsyncadd %s153, %s158
          %s160 = smul.addr %s19, 6
          %s161 = sadd.s32 %s20, %s160
          %s162 = smul.addr %s161, 128
          %s163 = scalar_lea.hbm %s0, %s162
          %s164 = sshll.u32 %s156, 4
          %s165 = int_to_ptr.vmem [resolvable:$true] %s164
          %170 = dma.hbm_to_vmem [thread:$0]  %s163, 384, %s165, %s153, 256, 128, 8
        $region24: #{tpu_custom_call.1} parent=19 // pred_fallthru
          _
        // Predicated region
        $region25: #{tpu_custom_call.1} parent=19 // pred_check
          %p171 = pneg %p93
        $region26: #{tpu_custom_call.1} parent=19 // pred_check_branch
          %173 = sbr.rel (%p171) target = $region28
        $region27: #{tpu_custom_call.1} parent=19 // pred_region
          %p174 = scmp.lt.s32.totalorder %s20, 1
          %s175 = scalar_select %p174, %s20, 1
          %s176 = smul.addr %s175, 2
          %s177 = scalar_lea.vmem %s2, %s176
        $region28: #{tpu_custom_call.1} parent=19 // pred_fallthru
          _
      $region20: #{tpu_custom_call.1} parent=5 // pred_fallthru
        _
      %p178 = scmp.le.s32.totalorder 1, %s12
      %p179 = scmp.lt.s32.totalorder %s12, 5
      %p180 = pnand %p178, %p179
      %p181 = pneg %p180
      // Predicated region
      $region29: #{tpu_custom_call.1} parent=5 // pred_check
        _
      $region30: #{tpu_custom_call.1} parent=5 // pred_check_branch
        %183 = sbr.rel (%p180) target = $region32
      $region31: #{tpu_custom_call.1} parent=5 // pred_region
        %s184 = ssub.s32 %s12, 1
        %s185 = sand.u32 %s39, 1
        %s186 = scalar_lea.sflag [#allocation3], %s185
        %s187 = sand.u32 %s39, 1
        %s188 = smul.addr %s187, 24
        %s189 = scalar_lea.vmem [#allocation2], %s188
        // Predicated region
        $region33: #{tpu_custom_call.1} parent=31 // pred_check
          %p190 = pneg %p52
        $region34: #{tpu_custom_call.1} parent=31 // pred_check_branch
          %192 = sbr.rel (%p190) target = $region36
        $region35: #{tpu_custom_call.1} parent=31 // pred_region
          %193 = dma.done %s186, 384
        $region36: #{tpu_custom_call.1} parent=31 // pred_fallthru
          _
        %s194 = sand.u32 %s39, 1
        %s195 = scalar_lea.sflag [#allocation3], %s194
        %s196 = sand.u32 %s39, 1
        %s197 = smul.addr %s196, 24
        %s198 = scalar_lea.vmem [#allocation2], %s197
        %p199 = pneg %p52
        %p200 = pneg %p49
        %p201 = pneg %p73
        %p202 = pneg %p70
        %p203 = scmp.lt.s32.totalorder %s22, 1
        %s204 = scalar_select %p203, %s22, 1
        %s205 = smul.addr %s204, 2
        %s206 = scalar_lea.vmem %s2, %s205
        %p207 = pneg %p99
        %p208 = pneg %p96
        %p209 = pneg %p127
        %p210 = pneg %p124
        %s211 = smul.u32 16, %s22
        %p212 = scmp.lt.s32.totalorder %s21, 1
        %s213 = scalar_select %p212, %s21, 1
        %p214 = scmp.lt.s32.totalorder %s211, 31
        %s215 = scalar_select %p214, %s211, 31
        %s216 = smul.addr %s213, 32
        %s217 = sadd.s32 %s215, %s216
        %s218 = smul.addr %s217, 8
        %s219 = scalar_lea.vmem %s3, %s218
        %p220 = scmp.lt.s32.totalorder %s22, 1
        %s221 = scalar_select %p220, %s22, 1
        %s222 = smul.addr %s221, 2
        %s223 = scalar_lea.vmem %s2, %s222
        %s224 = smul.u32 16, %s22
        %p225 = scmp.lt.s32.totalorder %s21, 1
        %s226 = scalar_select %p225, %s21, 1
        %p227 = scmp.lt.s32.totalorder %s224, 31
        %s228 = scalar_select %p227, %s224, 31
        %s229 = smul.addr %s226, 32
        %s230 = sadd.s32 %s228, %s229
        %s231 = smul.addr %s230, 8
        %s232 = scalar_lea.vmem %s3, %s231
        %s233 = smul.u32 16, %s22
        %v234 = vld [vmem:[%s189] sm:$0xff]
        %v235 = vld [vmem:[%s189 + $0x8] sm:$0xff]
        %v236 = vld [vmem:[%s189 + $0x10] sm:$0xff]
        %v237 = vld [vmem:[%s1] sm:$0xff]
        %v238 = vld [vmem:[%s1 + $0x8] sm:$0xff]
        %v239 = vld [vmem:[%s1 + $0x10] sm:$0xff]
        %vm240 = vcmp.gt.f32.partialorder %v237, 0.0
        %vm241 = vcmp.gt.f32.partialorder %v238, 0.0
        %vm242 = vcmp.gt.f32.partialorder %v239, 0.0
        %v243 = vld [vmem:[%s223] sm:$0x3]
        %v244 = vmul.f32 %v234, 1.442695
        %v245 = vpow.pop %v244
        %v246 = vmul.f32 %v235, 1.442695
        %v247 = vpow.pop %v246
        %v248 = vmul.f32 %v236, 1.442695
        %v249 = vpow.pop %v248
        %v250 = vadd.f32 %v245, 1.0
        %v251 = vadd.f32 %v247, 1.0
        %v252 = vadd.f32 %v249, 1.0
        %v253 = vrcp.pop %v250
        %v254 = vmul.f32 %v245, %v253
        %v255 = vrcp.pop %v251
        %v256 = vmul.f32 %v247, %v255
        %v257 = vrcp.pop %v252
        %v258 = vmul.f32 %v249, %v257
        %vm259 = vcmp.gt.f32.partialorder %v234, 30.0
        %vm260 = vcmp.gt.f32.partialorder %v235, 30.0
        %vm261 = vcmp.gt.f32.partialorder %v236, 30.0
        %v262 = vsel %vm259, 1.0, %v254
        %v263 = vsel %vm260, 1.0, %v256
        %v264 = vsel %vm261, 1.0, %v258
        %v265 = vsel %vm240, 1, 0
        %v266 = vsel %vm241, 1, 0
        %v267 = vsel %vm242, 1, 0
        %268 = vset.pattern.permute.xlu0 1
        %269 = vperm.xlu0 %268, %v265
        %v270 = vpop.permute.xlu0 %269
        %271 = vset.pattern.permute.xlu0 1
        %272 = vperm.xlu0 %271, %v266
        %v273 = vpop.permute.xlu0 %272
        %274 = vset.pattern.permute.xlu0 1
        %275 = vperm.xlu0 %274, %v267
        %v276 = vpop.permute.xlu0 %275
        %vm277 = vcmp.eq.s32.totalorder %v270, 1
        %vm278 = vcmp.eq.s32.totalorder %v273, 1
        %vm279 = vcmp.eq.s32.totalorder %v276, 1
        %v280 = vsel %vm277, %v245, %v262
        %v281 = vsel %vm278, %v247, %v263
        %v282 = vsel %vm279, %v249, %v264
        %284 = vset.pattern.permute.xlu0 0
        %285 = vperm.xlu0 %284, %v237
        %v286 = vpop.permute.xlu0 %285
        %289 = vset.pattern.permute.xlu0 0
        %290 = vperm.xlu0 %289, %v238
        %v291 = vpop.permute.xlu0 %290
        %294 = vset.pattern.permute.xlu0 0
        %295 = vperm.xlu0 %294, %v239
        %v296 = vpop.permute.xlu0 %295
        %v298 = vmul.f32 %v280, %v286
        %v299 = vmul.f32 %v281, %v291
        %v300 = vmul.f32 %v282, %v296
        %301 = vset.pattern.permute.xlu0 2
        %302 = vperm.xlu0 %301, %v237
        %v303 = vpop.permute.xlu0 %302
        %305 = vset.pattern.permute.xlu0 2
        %306 = vperm.xlu0 %305, %v238
        %v307 = vpop.permute.xlu0 %306
        %309 = vset.pattern.permute.xlu0 2
        %310 = vperm.xlu0 %309, %v239
        %v311 = vpop.permute.xlu0 %310
        %v313 = vlaneseq
        %v314 = vshrl.u32 %v313, 7
        %v315 = vsub.s32 0, %v314
        %v316 = vrot.slane %v243, %v315
        %v317 = vmul.f32 %v303, %v316
        %v318 = vmul.f32 %v307, %v316
        %v319 = vmul.f32 %v311, %v316
        %v320 = vadd.f32 %v298, %v317
        %v321 = vadd.f32 %v299, %v318
        %v322 = vadd.f32 %v300, %v319
        %323 = vset.pattern.permute.xlu0 3
        %324 = vperm.xlu0 %323, %v237
        %v325 = vpop.permute.xlu0 %324
        %327 = vset.pattern.permute.xlu0 3
        %328 = vperm.xlu0 %327, %v238
        %v329 = vpop.permute.xlu0 %328
        %331 = vset.pattern.permute.xlu0 3
        %332 = vperm.xlu0 %331, %v239
        %v333 = vpop.permute.xlu0 %332
        %v335 = vlaneseq
        %v336 = vshrl.u32 %v335, 7
        %v337 = vsub.s32 1, %v336
        %v338 = vrot.slane %v243, %v337
        %v339 = vmul.f32 %v325, %v338
        %v340 = vmul.f32 %v329, %v338
        %v341 = vmul.f32 %v333, %v338
        %v342 = vadd.f32 %v320, %v339
        %v343 = vadd.f32 %v321, %v340
        %v344 = vadd.f32 %v322, %v341
        %345 = vxpose.xlu0.b32.start [1/16] %v342, 128
        %346 = vxpose.xlu0.b32.cont [2/16] %v343, 128
        %347 = vxpose.xlu0.b32.cont [3/16] %v344, 128
        %348 = vxpose.xlu0.b32.cont [4/16] 0.0, 128
        %349 = vxpose.xlu0.b32.cont [5/16] 0.0, 128
        %350 = vxpose.xlu0.b32.cont [6/16] 0.0, 128
        %351 = vxpose.xlu0.b32.cont [7/16] 0.0, 128
        %352 = vxpose.xlu0.b32.cont [8/16] 0.0, 128
        %353 = vxpose.xlu0.b32.cont [9/16] 0.0, 128
        %354 = vxpose.xlu0.b32.cont [10/16] 0.0, 128
        %355 = vxpose.xlu0.b32.cont [11/16] 0.0, 128
        %356 = vxpose.xlu0.b32.cont [12/16] 0.0, 128
        %357 = vxpose.xlu0.b32.cont [13/16] 0.0, 128
        %358 = vxpose.xlu0.b32.cont [14/16] 0.0, 128
        %359 = vxpose.xlu0.b32.cont [15/16] 0.0, 128
        %360 = vxpose.xlu0.b32.end [16/16] 0.0, 128
        %v361 = vpop.trf.xlu0
        %v362 = vpop.trf.xlu0
        %v363 = vpop.trf.xlu0
        %v364 = vpop.trf.xlu0
        %v365 = vpop.trf.xlu0
        %v366 = vpop.trf.xlu0
        %v367 = vpop.trf.xlu0
        %v368 = vpop.trf.xlu0
        %v369 = vpop.trf.xlu0
        %v370 = vpop.trf.xlu0
        %v371 = vpop.trf.xlu0
        %v372 = vpop.trf.xlu0
        %v373 = vpop.trf.xlu0
        %v374 = vpop.trf.xlu0
        %v375 = vpop.trf.xlu0
        %v376 = vpop.trf.xlu0
        %vm377 = vcmask 195584
        %378 = vst.msk [vmem:[%s232] sm:$0xff] %vm377, %v361
        %379 = vst.msk [vmem:[%s232 + $0x8] sm:$0xff] %vm377, %v362
        %380 = vst.msk [vmem:[%s232 + $0x10] sm:$0xff] %vm377, %v363
        %381 = vst.msk [vmem:[%s232 + $0x18] sm:$0xff] %vm377, %v364
        %382 = vst.msk [vmem:[%s232 + $0x20] sm:$0xff] %vm377, %v365
        %383 = vst.msk [vmem:[%s232 + $0x28] sm:$0xff] %vm377, %v366
        %384 = vst.msk [vmem:[%s232 + $0x30] sm:$0xff] %vm377, %v367
        %385 = vst.msk [vmem:[%s232 + $0x38] sm:$0xff] %vm377, %v368
        %386 = vst.msk [vmem:[%s232 + $0x40] sm:$0xff] %vm377, %v369
        %387 = vst.msk [vmem:[%s232 + $0x48] sm:$0xff] %vm377, %v370
        %388 = vst.msk [vmem:[%s232 + $0x50] sm:$0xff] %vm377, %v371
        %389 = vst.msk [vmem:[%s232 + $0x58] sm:$0xff] %vm377, %v372
        %390 = vst.msk [vmem:[%s232 + $0x60] sm:$0xff] %vm377, %v373
        %391 = vst.msk [vmem:[%s232 + $0x68] sm:$0xff] %vm377, %v374
        %392 = vst.msk [vmem:[%s232 + $0x70] sm:$0xff] %vm377, %v375
        %393 = vst.msk [vmem:[%s232 + $0x78] sm:$0xff] %vm377, %v376
        %s394 = smul.u32 16, %s22
        %p395 = scmp.lt.s32.totalorder %s21, 1
        %s396 = scalar_select %p395, %s21, 1
        %p397 = scmp.lt.s32.totalorder %s394, 31
        %s398 = scalar_select %p397, %s394, 31
        %s399 = smul.addr %s396, 32
        %s400 = sadd.s32 %s398, %s399
        %s401 = smul.addr %s400, 8
        %s402 = scalar_lea.vmem %s3, %s401
        // Predicated region
        $region37: #{tpu_custom_call.1} parent=31 // pred_check
          %p403 = pneg %p124
        $region38: #{tpu_custom_call.1} parent=31 // pred_check_branch
          %405 = sbr.rel (%p403) target = $region40
        $region39: #{tpu_custom_call.1} parent=31 // pred_region
          %s406 = smul.u32 16, %s22
        $region40: #{tpu_custom_call.1} parent=31 // pred_fallthru
          _
      $region32: #{tpu_custom_call.1} parent=5 // pred_fallthru
        _
      %p407 = scmp.le.s32.totalorder 2, %s12
      // Predicated region
      $region41: #{tpu_custom_call.1} parent=5 // pred_check
        %p408 = pneg %p407
      $region42: #{tpu_custom_call.1} parent=5 // pred_check_branch
        %410 = sbr.rel (%p408) target = $region44
      $region43: #{tpu_custom_call.1} parent=5 // pred_region
        %s411 = ssub.s32 %s12, 2
        // Predicated region
        $region45: #{tpu_custom_call.1} parent=43 // pred_check
          %p412 = pneg %p130
        $region46: #{tpu_custom_call.1} parent=43 // pred_check_branch
          %414 = sbr.rel (%p412) target = $region48
        $region47: #{tpu_custom_call.1} parent=43 // pred_region
          %s415 = smul.u32 16, %s24
          %p416 = scmp.lt.s32.totalorder %s23, 1
          %s417 = scalar_select %p416, %s23, 1
          %p418 = scmp.lt.s32.totalorder %s415, 31
          %s419 = scalar_select %p418, %s415, 31
          %s420 = smul.addr %s417, 32
          %s421 = sadd.s32 %s419, %s420
          %s422 = smul.addr %s421, 8
          %s423 = scalar_lea.vmem %s3, %s422
        $region48: #{tpu_custom_call.1} parent=43 // pred_fallthru
          _
      $region44: #{tpu_custom_call.1} parent=5 // pred_fallthru
        _
    $region6: #{tpu_custom_call.1} parent=1 // loop_footer
      %s16 = sadd.s32 1, %s12
    $region7: #{tpu_custom_call.1} parent=1 // loop_footer_branch
      %11 = sbr.rel target = $region3
    $region8: #{tpu_custom_call.1} parent=1 // loop_exit
      _
    %424 = vsyncpa [#allocation3], 1
    %s425 = scalar_lea.sflag [#allocation3], 1
    %426 = vsyncpa %s425, 1

</llo_original>
